<compile_context>
chip_gen: v6e
topology: v6e:2x2x1
jax: 0.10.0
libtpu: 0.0.40
codegen_flags: <defaults>
</compile_context>

<pallas_src>
import functools

import jax
import jax.numpy as jnp
from jax.experimental import pallas as pl
from jax.experimental.pallas import tpu as pltpu


def _round_up(n, m):
    return ((n + m - 1) // m) * m


def mlp_kernel(x_ref, w1_ref, b1_ref, w2_ref, b2_ref, w4_ref, b4_ref, o_ref):
    # x_ref: [dim_in, TB] bf16, feature-major (batch on the lane axis).
    x = x_ref[...]  # bf16, fed straight to the MXU
    h1 = jnp.dot(w1_ref[...], x, preferred_element_type=jnp.float32) + b1_ref[...]
    h1 = jnp.maximum(h1, 0.0).astype(jnp.bfloat16)
    # TODO(synk): nn.Dropout(p=0.1) is identity in eval mode; training-mode RNG mask not implemented.
    h2 = jnp.dot(w2_ref[...], h1, preferred_element_type=jnp.float32) + b2_ref[...]
    h2 = jnp.maximum(h2, 0.0).astype(jnp.bfloat16)
    y = jnp.dot(w4_ref[...], h2, preferred_element_type=jnp.float32) + b4_ref[...]
    y = jnp.maximum(y, 0.0)
    o_ref[...] = y.astype(o_ref.dtype)


@functools.partial(jax.jit, static_argnames=("tb", "min_steps"))
def mlp_forward(x_fm, params, *, tb=32 * 1024, min_steps=4):
    """Feature-major MLP forward.

    x_fm:   [dim_in, B] bfloat16 (batch on the 128-lane axis).
    params: weights bf16 in natural PyTorch [out, in] layout, biases f32 [out, 1].
    Returns [dim_out, B] bfloat16.
    """
    dim_in, B = x_fm.shape
    dim_out = params["w4"].shape[0]

    # Lane-aligned batch tile: as large as possible (amortize per-grid-step
    # overhead) but keep at least `min_steps` grid iterations so the
    # "parallel" batch axis shards across both TensorCores on v7x.
    Bp = _round_up(B, 128)
    tb_eff = min(tb, Bp)
    if Bp // tb_eff < min_steps:
        tb_eff = max(128, _round_up(pl.cdiv(Bp, min_steps), 128))
    grid = (pl.cdiv(B, tb_eff),)

    # Grid-invariant full blocks for the tiny weights/biases -> stay resident
    # in VMEM across all grid steps.
    def full(shape):
        return pl.BlockSpec(shape, lambda i: (0, 0))

    return pl.pallas_call(
        mlp_kernel,
        out_shape=jax.ShapeDtypeStruct((dim_out, B), jnp.bfloat16),
        grid=grid,
        in_specs=[
            pl.BlockSpec((dim_in, tb_eff), lambda i: (0, i)),  # x tile (lane-dense)
            full(params["w1"].shape), full(params["b1"].shape),
            full(params["w2"].shape), full(params["b2"].shape),
            full(params["w4"].shape), full(params["b4"].shape),
        ],
        out_specs=pl.BlockSpec((dim_out, tb_eff), lambda i: (0, i)),
        compiler_params=pltpu.CompilerParams(
            dimension_semantics=("parallel",),
            vmem_limit_bytes=48 * 1024 * 1024,
        ),
    )(
        x_fm,
        params["w1"], params["b1"],
        params["w2"], params["b2"],
        params["w4"], params["b4"],
    )


def init_params(key, dim_in, dim_out):
    """PyTorch Linear default init: U(-1/sqrt(fan_in), 1/sqrt(fan_in)).
    Weights in natural [out, in] layout; biases as [out, 1] so they broadcast
    along the lane (batch) axis inside the kernel."""
    def linear(k, fan_in, fan_out):
        kw, kb = jax.random.split(k)
        bound = 1.0 / jnp.sqrt(fan_in)
        w = jax.random.uniform(kw, (fan_out, fan_in), jnp.float32, -bound, bound)
        b = jax.random.uniform(kb, (fan_out, 1), jnp.float32, -bound, bound)
        return w, b

    k1, k2, k3, k4 = jax.random.split(key, 4)
    w1, b1 = linear(k1, dim_in, dim_in)
    w2, b2 = linear(k2, dim_in, dim_in)
    _w3, _b3 = linear(k3, dim_in, dim_in)  # lin3 defined in __init__ but unused in forward
    w4, b4 = linear(k4, dim_in, dim_out)
    return {"w1": w1, "b1": b1, "w2": w2, "b2": b2, "w4": w4, "b4": b4}


def prepare_params(params_f32):
    """One-time cast of the weight matrices to bf16 (fed straight to the MXU);
    biases stay f32 (added to the f32 accumulator)."""
    out = dict(params_f32)
    for k in ("w1", "w2", "w4"):
        out[k] = params_f32[k].astype(jnp.bfloat16)
    return out


def reference_forward(x, p):
    """Batch-major f32 reference (matches PyTorch forward, dropout = identity)."""
    h1 = jnp.maximum(x @ p["w1"].T + p["b1"].T, 0.0)
    h2 = jnp.maximum(h1 @ p["w2"].T + p["b2"].T, 0.0)
    return jnp.maximum(h2 @ p["w4"].T + p["b4"].T, 0.0)


if __name__ == "__main__":
    hparam = {"FEAT": 5, "PAR_FIX": 3, "PAR_VAR": 1, "BATCH_SIZE": 20}
    dim_in = hparam["FEAT"] + hparam["PAR_FIX"] + hparam["PAR_VAR"]  # 9
    dim_out = hparam["FEAT"]  # 5
    batch = hparam["BATCH_SIZE"]  # 20

    key = jax.random.PRNGKey(0)
    kx, kp = jax.random.split(key)

    # Activations live feature-major ([dim, B]) in bf16 end-to-end, so the
    # kernel reads/writes HBM directly with no wrapper transpose/cast/pad ops.
    x_fm = jax.random.normal(kx, (dim_in, batch), jnp.float32).astype(jnp.bfloat16)

    params_f32 = init_params(kp, dim_in, dim_out)
    params = prepare_params(params_f32)

    y_fm = mlp_forward(x_fm, params)
    y_fm = jax.block_until_ready(y_fm)
    assert y_fm.shape == (dim_out, batch)
    assert y_fm.dtype == jnp.bfloat16

    # Reference (PyTorch forward semantics, dropout = identity), computed in
    # f32 on the same bf16-rounded inputs/weights the kernel consumed.
    x_bm = x_fm.astype(jnp.float32).T                                 # [B, dim_in]
    ref_params = {k: v.astype(jnp.float32) for k, v in params.items()}
    y_ref = reference_forward(x_bm, ref_params)                       # [B, dim_out]

    y = y_fm.astype(jnp.float32).T
    max_err = float(jnp.max(jnp.abs(y - y_ref)))
    # bf16 activations/weights/output -> ~2^-9 relative rounding per stage.
    assert jnp.allclose(y, y_ref, atol=2e-2, rtol=2e-2), max_err

    print("KERNEL_OK")
</pallas_src>

<mosaic_0001>
module attributes {stable_mosaic.version = 11 : i64} {
  func.func @mlp_kernel(%arg0: i32, %arg1: memref<9x128xbf16, #tpu.memory_space<vmem>>, %arg2: memref<9x9xbf16, #tpu.memory_space<vmem>>, %arg3: memref<9x1xf32, #tpu.memory_space<vmem>>, %arg4: memref<9x9xbf16, #tpu.memory_space<vmem>>, %arg5: memref<9x1xf32, #tpu.memory_space<vmem>>, %arg6: memref<5x9xbf16, #tpu.memory_space<vmem>>, %arg7: memref<5x1xf32, #tpu.memory_space<vmem>>, %arg8: memref<5x128xbf16, #tpu.memory_space<vmem>>) attributes {dimension_semantics = [#tpu.dimension_semantics<parallel>], iteration_bounds = array<i64: 1>, scalar_prefetch = 0 : i64, scratch_operands = 0 : i64, tpu.core_type = #tpu.core_type<tc>, window_params = [{transform_indices = @transform_0, window_bounds = array<i64: 9, 128>}, {pipeline_mode = #tpu.pipeline_mode<synchronous>, transform_indices = @transform_1, window_bounds = array<i64: 9, 9>}, {pipeline_mode = #tpu.pipeline_mode<synchronous>, transform_indices = @transform_2, window_bounds = array<i64: 9, 1>}, {pipeline_mode = #tpu.pipeline_mode<synchronous>, transform_indices = @transform_3, window_bounds = array<i64: 9, 9>}, {pipeline_mode = #tpu.pipeline_mode<synchronous>, transform_indices = @transform_4, window_bounds = array<i64: 9, 1>}, {pipeline_mode = #tpu.pipeline_mode<synchronous>, transform_indices = @transform_5, window_bounds = array<i64: 5, 9>}, {pipeline_mode = #tpu.pipeline_mode<synchronous>, transform_indices = @transform_6, window_bounds = array<i64: 5, 1>}, {transform_indices = @transform_7, window_bounds = array<i64: 5, 128>}]} {
    %c0 = arith.constant 0 : index
    %c0_0 = arith.constant 0 : index
    %0 = vector.load %arg1[%c0, %c0_0] : memref<9x128xbf16, #tpu.memory_space<vmem>>, vector<9x128xbf16>
    %c0_1 = arith.constant 0 : index
    %c0_2 = arith.constant 0 : index
    %1 = vector.load %arg2[%c0_1, %c0_2] : memref<9x9xbf16, #tpu.memory_space<vmem>>, vector<9x9xbf16>
    %cst = arith.constant dense<0.000000e+00> : vector<9x128xf32>
    %2 = tpu.matmul %1, %0, %cst {dimension_numbers = #tpu.dot_dimension_numbers<[1], [0], [0], [1], [0, 0, 1, 1], [], []>} : vector<9x9xbf16>, vector<9x128xbf16>, vector<9x128xf32> -> vector<9x128xf32>
    %c0_3 = arith.constant 0 : index
    %c0_4 = arith.constant 0 : index
    %3 = vector.load %arg3[%c0_3, %c0_4] : memref<9x1xf32, #tpu.memory_space<vmem>>, vector<9x1xf32>
    %4 = vector.broadcast %3 : vector<9x1xf32> to vector<9x128xf32>
    %5 = arith.addf %2, %4 : vector<9x128xf32>
    %cst_5 = arith.constant 0.000000e+00 : f32
    %6 = vector.broadcast %cst_5 : f32 to vector<9x128xf32>
    %7 = arith.maximumf %5, %6 : vector<9x128xf32>
    %8 = arith.truncf %7 : vector<9x128xf32> to vector<9x128xbf16>
    %c0_6 = arith.constant 0 : index
    %c0_7 = arith.constant 0 : index
    %9 = vector.load %arg4[%c0_6, %c0_7] : memref<9x9xbf16, #tpu.memory_space<vmem>>, vector<9x9xbf16>
    %cst_8 = arith.constant dense<0.000000e+00> : vector<9x128xf32>
    %10 = tpu.matmul %9, %8, %cst_8 {dimension_numbers = #tpu.dot_dimension_numbers<[1], [0], [0], [1], [0, 0, 1, 1], [], []>} : vector<9x9xbf16>, vector<9x128xbf16>, vector<9x128xf32> -> vector<9x128xf32>
    %c0_9 = arith.constant 0 : index
    %c0_10 = arith.constant 0 : index
    %11 = vector.load %arg5[%c0_9, %c0_10] : memref<9x1xf32, #tpu.memory_space<vmem>>, vector<9x1xf32>
    %12 = vector.broadcast %11 : vector<9x1xf32> to vector<9x128xf32>
    %13 = arith.addf %10, %12 : vector<9x128xf32>
    %cst_11 = arith.constant 0.000000e+00 : f32
    %14 = vector.broadcast %cst_11 : f32 to vector<9x128xf32>
    %15 = arith.maximumf %13, %14 : vector<9x128xf32>
    %16 = arith.truncf %15 : vector<9x128xf32> to vector<9x128xbf16>
    %c0_12 = arith.constant 0 : index
    %c0_13 = arith.constant 0 : index
    %17 = vector.load %arg6[%c0_12, %c0_13] : memref<5x9xbf16, #tpu.memory_space<vmem>>, vector<5x9xbf16>
    %cst_14 = arith.constant dense<0.000000e+00> : vector<5x128xf32>
    %18 = tpu.matmul %17, %16, %cst_14 {dimension_numbers = #tpu.dot_dimension_numbers<[1], [0], [0], [1], [0, 0, 1, 1], [], []>} : vector<5x9xbf16>, vector<9x128xbf16>, vector<5x128xf32> -> vector<5x128xf32>
    %c0_15 = arith.constant 0 : index
    %c0_16 = arith.constant 0 : index
    %19 = vector.load %arg7[%c0_15, %c0_16] : memref<5x1xf32, #tpu.memory_space<vmem>>, vector<5x1xf32>
    %20 = vector.broadcast %19 : vector<5x1xf32> to vector<5x128xf32>
    %21 = arith.addf %18, %20 : vector<5x128xf32>
    %cst_17 = arith.constant 0.000000e+00 : f32
    %22 = vector.broadcast %cst_17 : f32 to vector<5x128xf32>
    %23 = arith.maximumf %21, %22 : vector<5x128xf32>
    %24 = arith.truncf %23 : vector<5x128xf32> to vector<5x128xbf16>
    %c0_18 = arith.constant 0 : index
    %c0_19 = arith.constant 0 : index
    %25 = vector.load %arg8[%c0_18, %c0_19] : memref<5x128xbf16, #tpu.memory_space<vmem>>, vector<5x128xbf16>
    tpu.vector_store %arg8[%c0_18, %c0_19], %24 {strides = array<i32>} : memref<5x128xbf16, #tpu.memory_space<vmem>>, vector<5x128xbf16>,
    return
  }
  func.func @transform_0(%arg0: i32) -> (i32, i32) {
    %c0_i32 = arith.constant 0 : i32
    %c0_i32_0 = arith.constant 0 : i32
    return %c0_i32, %arg0 : i32, i32
  }
  func.func @transform_1(%arg0: i32) -> (i32, i32) {
    %c0_i32 = arith.constant 0 : i32
    %c0_i32_0 = arith.constant 0 : i32
    %c0_i32_1 = arith.constant 0 : i32
    return %c0_i32, %c0_i32_0 : i32, i32
  }
  func.func @transform_2(%arg0: i32) -> (i32, i32) {
    %c0_i32 = arith.constant 0 : i32
    %c0_i32_0 = arith.constant 0 : i32
    %c0_i32_1 = arith.constant 0 : i32
    return %c0_i32, %c0_i32_0 : i32, i32
  }
  func.func @transform_3(%arg0: i32) -> (i32, i32) {
    %c0_i32 = arith.constant 0 : i32
    %c0_i32_0 = arith.constant 0 : i32
    %c0_i32_1 = arith.constant 0 : i32
    return %c0_i32, %c0_i32_0 : i32, i32
  }
  func.func @transform_4(%arg0: i32) -> (i32, i32) {
    %c0_i32 = arith.constant 0 : i32
    %c0_i32_0 = arith.constant 0 : i32
    %c0_i32_1 = arith.constant 0 : i32
    return %c0_i32, %c0_i32_0 : i32, i32
  }
  func.func @transform_5(%arg0: i32) -> (i32, i32) {
    %c0_i32 = arith.constant 0 : i32
    %c0_i32_0 = arith.constant 0 : i32
    %c0_i32_1 = arith.constant 0 : i32
    return %c0_i32, %c0_i32_0 : i32, i32
  }
  func.func @transform_6(%arg0: i32) -> (i32, i32) {
    %c0_i32 = arith.constant 0 : i32
    %c0_i32_0 = arith.constant 0 : i32
    %c0_i32_1 = arith.constant 0 : i32
    return %c0_i32, %c0_i32_0 : i32, i32
  }
  func.func @transform_7(%arg0: i32) -> (i32, i32) {
    %c0_i32 = arith.constant 0 : i32
    %c0_i32_0 = arith.constant 0 : i32
    return %c0_i32, %arg0 : i32, i32
  }
}

</mosaic_0001>

<llo_original>
// kernel: mlp_forward.1
$region0: #{mlp_forward.1}
  #allocation0 [shape = 'u32[]', space=smem, size = 0x4, offset = 0x4, fixed_abs, tag = 'smem constant byte address 0x4 - core index']
  #allocation1 [shape = 'u32[144,128]{1,0:T(1,128)}', space=vmem, size = 0x12000, scoped, tag = 'internal scratch']
  %s0 = inlined_call_operand.vmem [shape: bf16[9,20], index: 0, kind: input, shape index: {}]
  %s1 = inlined_call_operand.vmem [shape: bf16[9,9], index: 1, kind: input, shape index: {}]
  %s2 = inlined_call_operand.vmem [shape: f32[9,1], index: 2, kind: input, shape index: {}]
  %s3 = inlined_call_operand.vmem [shape: bf16[9,9], index: 3, kind: input, shape index: {}]
  %s4 = inlined_call_operand.vmem [shape: f32[9,1], index: 4, kind: input, shape index: {}]
  %s5 = inlined_call_operand.vmem [shape: bf16[5,9], index: 5, kind: input, shape index: {}]
  %s6 = inlined_call_operand.vmem [shape: f32[5,1], index: 6, kind: input, shape index: {}]
  %s7 = inlined_call_operand.hbm [shape: bf16[5,20], index: 7, kind: output, shape index: {}]
  %s8 = sld [smem:[#allocation0]]
  $region38: #{mlp_forward.1} parent=0
    _
  %s10 = ssub.s32 1, %s8
  %s11 = scalar_select 0, %s10, %s8
  $region1: #{mlp_forward.1} parent=0
    #allocation2 [shape = 'u8[2048]{0}', space=vmem, size = 0x800, scoped, tag = 'output window, operand 0, single buffered']
    #allocation3 [shape = 's32[1]{0}', space=sflag, size = 0x4, scoped, tag = 'scoped memory for mlp_forward.1']
    %12 = vsyncpa [#allocation3], 0
    // Predicated region
    $region2: #{mlp_forward.1} parent=1 // pred_check
      _
    $region3: #{mlp_forward.1} parent=1 // pred_check_branch
      %14 = sbr.rel (0) target = $region5
    $region4: #{mlp_forward.1} parent=1 // pred_region
      _
    $region5: #{mlp_forward.1} parent=1 // pred_fallthru
      _
    // Predicated region
    $region6: #{mlp_forward.1} parent=1 // pred_check
      _
    $region7: #{mlp_forward.1} parent=1 // pred_check_branch
      %16 = sbr.rel (0) target = $region9
    $region8: #{mlp_forward.1} parent=1 // pred_region
      _
    $region9: #{mlp_forward.1} parent=1 // pred_fallthru
      _
    // Predicated region
    $region10: #{mlp_forward.1} parent=1 // pred_check
      _
    $region11: #{mlp_forward.1} parent=1 // pred_check_branch
      %18 = sbr.rel (0) target = $region13
    $region12: #{mlp_forward.1} parent=1 // pred_region
      _
    $region13: #{mlp_forward.1} parent=1 // pred_fallthru
      _
    // Predicated region
    $region14: #{mlp_forward.1} parent=1 // pred_check
      _
    $region15: #{mlp_forward.1} parent=1 // pred_check_branch
      %20 = sbr.rel (0) target = $region17
    $region16: #{mlp_forward.1} parent=1 // pred_region
      _
    $region17: #{mlp_forward.1} parent=1 // pred_fallthru
      _
    // Predicated region
    $region18: #{mlp_forward.1} parent=1 // pred_check
      _
    $region19: #{mlp_forward.1} parent=1 // pred_check_branch
      %22 = sbr.rel (0) target = $region21
    $region20: #{mlp_forward.1} parent=1 // pred_region
      _
    $region21: #{mlp_forward.1} parent=1 // pred_fallthru
      _
    // Predicated region
    $region22: #{mlp_forward.1} parent=1 // pred_check
      _
    $region23: #{mlp_forward.1} parent=1 // pred_check_branch
      %24 = sbr.rel (0) target = $region25
    $region24: #{mlp_forward.1} parent=1 // pred_region
      _
    $region25: #{mlp_forward.1} parent=1 // pred_fallthru
      _
    // Predicated region
    $region26: #{mlp_forward.1} parent=1 // pred_check
      _
    $region27: #{mlp_forward.1} parent=1 // pred_check_branch
      %26 = sbr.rel (0) target = $region29
    $region28: #{mlp_forward.1} parent=1 // pred_region
      _
    $region29: #{mlp_forward.1} parent=1 // pred_fallthru
      _
    %v28 = vld [vmem:[%s0] sm:$0xf]
    %v29 = vld [vmem:[%s0 + $0x4] sm:$0x1]
    %v30 = vld [vmem:[%s1] sm:$0xf]
    %v31 = vld [vmem:[%s1 + $0x4] sm:$0x1]
    %v32 = vld [vmem:[%s2] sm:$0xff]
    %v33 = vld [vmem:[%s2 + $0x8] sm:$0x1]
    %35 = vset.pattern.permute.xlu0 0
    %36 = vperm.xlu0 %35, %v32
    %v37 = vpop.permute.xlu0 %36
    %40 = vset.pattern.permute.xlu0 0
    %41 = vperm.xlu0 %40, %v33
    %v42 = vpop.permute.xlu0 %41
    %v46 = vunpack.c.l.b16 %v30
    %v47 = vunpack.c.l.b16 %v31
    %v48 = vpack.c.b16 %v47, %v46
    %v51 = vunpack.c.l.b16 %v28
    %v52 = vunpack.c.l.b16 %v29
    %v53 = vpack.c.b16 %v52, %v51
    %vm54 = vcmask 72704
    %v56 = vsel %vm54, %v48, 0
    %vm58 = vcmask 1043456
    %vm59 = vcmask 1044480
    %v60 = vsel %vm58, 4294967295, 65535
    %v61 = vsel %vm59, %v60, 0
    %v63 = vand.u32 %v53, %v61
    %65 = vmatprep.subr.bf16.mxu0 0
    %66 = vmatpush1.bf16.msra.mxu0 0
    %67 = vmatprep.subr.bf16.mxu0 0
    %68 = vmatpush1.bf16.msra.mxu0 0
    %69 = vmatprep.subr.bf16.mxu0 0
    %70 = vmatpush1.bf16.msra.mxu0 0
    %71 = vmatprep.subr.bf16.mxu0 0
    %72 = vmatpush1.bf16.msra.mxu0 0
    %73 = vmatprep.subr.bf16.mxu0 0
    %74 = vmatpush1.bf16.msra.mxu0 0
    %75 = vmatprep.subr.bf16.mxu0 0
    %76 = vmatpush1.bf16.msra.mxu0 0
    %77 = vmatprep.subr.bf16.mxu0 0
    %78 = vmatpush1.bf16.msra.mxu0 0
    %79 = vmatprep.subr.bf16.mxu0 0
    %80 = vmatpush1.bf16.msra.mxu0 %v63
    %81 = vmatprep.subr.bf16.mxu0 0
    %82 = vmatpush2.bf16.msra.mxu0 0
    %83 = vmatprep.subr.bf16.mxu0 0
    %84 = vmatpush2.bf16.msra.mxu0 0
    %85 = vmatprep.subr.bf16.mxu0 0
    %86 = vmatpush2.bf16.msra.mxu0 0
    %87 = vmatprep.subr.bf16.mxu0 0
    %88 = vmatpush2.bf16.msra.mxu0 0
    %89 = vmatprep.subr.bf16.mxu0 0
    %90 = vmatpush2.bf16.msra.mxu0 0
    %91 = vmatprep.subr.bf16.mxu0 0
    %92 = vmatpush2.bf16.msra.mxu0 0
    %93 = vmatprep.subr.bf16.mxu0 0
    %94 = vmatpush2.bf16.msra.mxu0 0
    %95 = vmatprep.subr.bf16.mxu0 0
    %96 = vmatpush2.bf16.msra.mxu0 0
    %97 = vmatprep.mubr.bf16.mxu0 0
    %98 = vmatmul.mubr.bf16.gmra.mxu0 %v56
    %v99 = vpop.f32.mrf.mxu0
    %v100 = vadd.f32 %v37, %v99
    %v101 = vpop.f32.mrf.mxu0
    %v102 = vpop.f32.mrf.mxu0
    %v103 = vadd.f32 %v42, %v102
    %v104 = vpop.f32.mrf.mxu0
    %105 = vdwg.mxu0
    %v106 = vmax.f32 %v100, 0.0
    %v107 = vmax.f32 %v103, 0.0
    %v108 = vpack.c.bf16 %v107, %v106
    %v109 = vld [vmem:[%s3] sm:$0xf]
    %v110 = vld [vmem:[%s3 + $0x4] sm:$0x1]
    %v111 = vld [vmem:[%s4] sm:$0xff]
    %v112 = vld [vmem:[%s4 + $0x8] sm:$0x1]
    %114 = vset.pattern.permute.xlu0 0
    %115 = vperm.xlu0 %114, %v111
    %v116 = vpop.permute.xlu0 %115
    %119 = vset.pattern.permute.xlu0 0
    %120 = vperm.xlu0 %119, %v112
    %v121 = vpop.permute.xlu0 %120
    %v125 = vunpack.c.l.b16 %v109
    %v126 = vunpack.c.l.b16 %v110
    %v127 = vpack.c.b16 %v126, %v125
    %v129 = vsel %vm54, %v127, 0
    %v132 = vand.u32 %v108, %v61
    %134 = vmatprep.subr.bf16.mxu0 0
    %135 = vmatpush1.bf16.msra.mxu0 0
    %136 = vmatprep.subr.bf16.mxu0 0
    %137 = vmatpush1.bf16.msra.mxu0 0
    %138 = vmatprep.subr.bf16.mxu0 0
    %139 = vmatpush1.bf16.msra.mxu0 0
    %140 = vmatprep.subr.bf16.mxu0 0
    %141 = vmatpush1.bf16.msra.mxu0 0
    %142 = vmatprep.subr.bf16.mxu0 0
    %143 = vmatpush1.bf16.msra.mxu0 0
    %144 = vmatprep.subr.bf16.mxu0 0
    %145 = vmatpush1.bf16.msra.mxu0 0
    %146 = vmatprep.subr.bf16.mxu0 0
    %147 = vmatpush1.bf16.msra.mxu0 0
    %148 = vmatprep.subr.bf16.mxu0 0
    %149 = vmatpush1.bf16.msra.mxu0 %v132
    %150 = vmatprep.subr.bf16.mxu0 0
    %151 = vmatpush2.bf16.msra.mxu0 0
    %152 = vmatprep.subr.bf16.mxu0 0
    %153 = vmatpush2.bf16.msra.mxu0 0
    %154 = vmatprep.subr.bf16.mxu0 0
    %155 = vmatpush2.bf16.msra.mxu0 0
    %156 = vmatprep.subr.bf16.mxu0 0
    %157 = vmatpush2.bf16.msra.mxu0 0
    %158 = vmatprep.subr.bf16.mxu0 0
    %159 = vmatpush2.bf16.msra.mxu0 0
    %160 = vmatprep.subr.bf16.mxu0 0
    %161 = vmatpush2.bf16.msra.mxu0 0
    %162 = vmatprep.subr.bf16.mxu0 0
    %163 = vmatpush2.bf16.msra.mxu0 0
    %164 = vmatprep.subr.bf16.mxu0 0
    %165 = vmatpush2.bf16.msra.mxu0 0
    %166 = vmatprep.mubr.bf16.mxu0 0
    %167 = vmatmul.mubr.bf16.gmra.mxu0 %v129
    %v168 = vpop.f32.mrf.mxu0
    %v169 = vadd.f32 %v116, %v168
    %v170 = vpop.f32.mrf.mxu0
    %v171 = vpop.f32.mrf.mxu0
    %v172 = vadd.f32 %v121, %v171
    %v173 = vpop.f32.mrf.mxu0
    %174 = vdwg.mxu0
    %v175 = vmax.f32 %v169, 0.0
    %v176 = vmax.f32 %v172, 0.0
    %v177 = vpack.c.bf16 %v176, %v175
    %v178 = vld [vmem:[%s5] sm:$0x7]
    %v179 = vld [vmem:[%s6] sm:$0x1f]
    %181 = vset.pattern.permute.xlu0 0
    %182 = vperm.xlu0 %181, %v179
    %v183 = vpop.permute.xlu0 %182
    %v186 = vsel %vm54, %v178, 0
    %v189 = vand.u32 %v177, %v61
    %191 = vmatprep.subr.bf16.mxu0 0
    %192 = vmatpush1.bf16.msra.mxu0 0
    %193 = vmatprep.subr.bf16.mxu0 0
    %194 = vmatpush1.bf16.msra.mxu0 0
    %195 = vmatprep.subr.bf16.mxu0 0
    %196 = vmatpush1.bf16.msra.mxu0 0
    %197 = vmatprep.subr.bf16.mxu0 0
    %198 = vmatpush1.bf16.msra.mxu0 0
    %199 = vmatprep.subr.bf16.mxu0 0
    %200 = vmatpush1.bf16.msra.mxu0 0
    %201 = vmatprep.subr.bf16.mxu0 0
    %202 = vmatpush1.bf16.msra.mxu0 0
    %203 = vmatprep.subr.bf16.mxu0 0
    %204 = vmatpush1.bf16.msra.mxu0 0
    %205 = vmatprep.subr.bf16.mxu0 0
    %206 = vmatpush1.bf16.msra.mxu0 %v189
    %207 = vmatprep.subr.bf16.mxu0 0
    %208 = vmatpush2.bf16.msra.mxu0 0
    %209 = vmatprep.subr.bf16.mxu0 0
    %210 = vmatpush2.bf16.msra.mxu0 0
    %211 = vmatprep.subr.bf16.mxu0 0
    %212 = vmatpush2.bf16.msra.mxu0 0
    %213 = vmatprep.subr.bf16.mxu0 0
    %214 = vmatpush2.bf16.msra.mxu0 0
    %215 = vmatprep.subr.bf16.mxu0 0
    %216 = vmatpush2.bf16.msra.mxu0 0
    %217 = vmatprep.subr.bf16.mxu0 0
    %218 = vmatpush2.bf16.msra.mxu0 0
    %219 = vmatprep.subr.bf16.mxu0 0
    %220 = vmatpush2.bf16.msra.mxu0 0
    %221 = vmatprep.subr.bf16.mxu0 0
    %222 = vmatpush2.bf16.msra.mxu0 0
    %223 = vmatprep.mubr.bf16.mxu0 0
    %224 = vmatmul.mubr.bf16.gmra.mxu0 %v186
    %v225 = vpop.f32.mrf.mxu0
    %v226 = vadd.f32 %v183, %v225
    %v227 = vpop.f32.mrf.mxu0
    %v228 = vpop.f32.mrf.mxu0
    %v229 = vpop.f32.mrf.mxu0
    %230 = vdwg.mxu0
    %v231 = vmax.f32 %v226, 0.0
    %v232 = vpack.c.bf16 %v231, %v231
    %vm233 = vcmask 1042432
    %vm234 = vsmask.f32 2304
    %vm235 = vmand %vm233, %vm234
    %v236 = vld [vmem:[#allocation2] sm:$0x7]
    %v237 = vsel %vm235, %v232, %v236
    %238 = vst [vmem:[#allocation2] sm:$0x7] %v237
    // Predicated region
    $region30: #{mlp_forward.1} parent=1 // pred_check
      _
    $region31: #{mlp_forward.1} parent=1 // pred_check_branch
      %240 = sbr.rel (0) target = $region33
    $region32: #{mlp_forward.1} parent=1 // pred_region
      %s242 = ssub.s32 64, 64
      %243 = vsyncadd [#allocation3], %s242
      %s245 = sshll.u32 [#allocation2], 4
      %s246 = int_to_ptr.vmem [resolvable:$true] %s245
      %248 = dma.vmem_to_hbm [thread:$0]  %s246, 64, %s7, [#allocation3]
    $region33: #{mlp_forward.1} parent=1 // pred_fallthru
      _
    // Predicated region
    $region34: #{mlp_forward.1} parent=1 // pred_check
      _
    $region35: #{mlp_forward.1} parent=1 // pred_check_branch
      %250 = sbr.rel (0) target = $region37
    $region36: #{mlp_forward.1} parent=1 // pred_region
      %251 = dma.done [#allocation3], 64
    $region37: #{mlp_forward.1} parent=1 // pred_fallthru
      _
    %252 = vsyncpa [#allocation3], 1

</llo_original>
